<compile_context>
chip_gen: v5e
topology: v5e:2x2
jax: 0.10.0
libtpu: 0.0.40
codegen_flags: <defaults>
</compile_context>

<pallas_src>
import functools
import math

import jax
import jax.numpy as jnp
from jax.experimental import pallas as pl
from jax.experimental.pallas import tpu as pltpu


def make_positional_encoding_table(max_len, model_dimension, dtype=jnp.float32):
    """Same buffer as the PyTorch __init__, stored as a 2-D (max_len, D) table."""
    position = jnp.arange(0, max_len, dtype=jnp.float32)[:, None]
    div_term = jnp.exp(jnp.arange(0, model_dimension, 2, dtype=jnp.float32)
                       * (-math.log(10000.0) / model_dimension))
    pe = jnp.zeros((max_len, model_dimension), dtype=jnp.float32)
    pe = pe.at[:, 0::2].set(jnp.sin(position * div_term))
    pe = pe.at[:, 1::2].set(jnp.cos(position * div_term))
    return pe.astype(dtype)


def _pe_add_kernel(x_ref, pe_ref, o_ref, *, batch):
    # x_ref/o_ref: (TS, B*D) lane-dense slab; pe_ref: (TS, D).
    pe_wide = jnp.tile(pe_ref[...], (1, batch))          # broadcast PE over the batch chunks
    o_ref[...] = x_ref[...] + pe_wide


def _pe_add_dropout_kernel(x_ref, pe_ref, scale_ref, o_ref, *, batch):
    # scale_ref holds 0 (dropped) or 1/(1-p) (kept), already in x.dtype.
    pe_wide = jnp.tile(pe_ref[...], (1, batch))
    o_ref[...] = (x_ref[...] + pe_wide) * scale_ref[...]


def _choose_row_tile(num_rows, row_bytes, budget_bytes):
    ts = max(1, min(num_rows, budget_bytes // max(int(row_bytes), 1)))
    if ts < num_rows:
        ts = max(8, (ts // 8) * 8)   # keep the second-minor block dim a multiple of 8 sublanes
    return ts


def positional_encoding_forward(x, pe_table, *, p=0.1, training=False, rng_key=None,
                                row_tile_bytes=2 << 20):
    """x: (S, B, D) seq-first (PyTorch convention); pe_table: (max_len, D)."""
    S, B, D = x.shape
    dt = x.dtype
    cols = B * D

    x2 = x.reshape(S, cols)            # free contiguous view -> lane-dense last dim
    pe2 = pe_table.astype(dt)          # tiny; keeps all in-kernel math in x.dtype

    ts = _choose_row_tile(S, cols * jnp.dtype(dt).itemsize, row_tile_bytes)
    grid = (pl.cdiv(S, ts),)

    slab_spec = pl.BlockSpec((ts, cols), lambda i: (i, 0))
    pe_spec = pl.BlockSpec((ts, D), lambda i: (i, 0))   # windows the full table; no pe[:S] copy

    apply_dropout = training and p > 0.0
    if apply_dropout:
        if rng_key is None:
            rng_key = jax.random.PRNGKey(0)
        keep = jax.random.bernoulli(rng_key, 1.0 - p, (S, cols))
        scale = keep.astype(dt) * jnp.asarray(1.0 / (1.0 - p), dtype=dt)
        kernel = functools.partial(_pe_add_dropout_kernel, batch=B)
        in_specs = [slab_spec, pe_spec, slab_spec]
        operands = (x2, pe2, scale)
    else:
        kernel = functools.partial(_pe_add_kernel, batch=B)
        in_specs = [slab_spec, pe_spec]
        operands = (x2, pe2)

    out2 = pl.pallas_call(
        kernel,
        out_shape=jax.ShapeDtypeStruct((S, cols), dt),
        grid=grid,
        in_specs=in_specs,
        out_specs=slab_spec,
        input_output_aliases={0: 0},          # output reuses x's buffer (same shape/dtype)
        compiler_params=pltpu.CompilerParams(
            dimension_semantics=("parallel",),  # independent rows -> megacore-shardable
        ),
    )(*operands)
    return out2.reshape(S, B, D)


if __name__ == "__main__":
    # Module hyperparameters (deterministic, in-script).
    model_dimension = 32
    dropout_p = 0.1
    max_len = 16
    seq_len, batch = 8, 2

    key = jax.random.PRNGKey(0)
    k_x, k_drop = jax.random.split(key)
    x = jax.random.normal(k_x, (seq_len, batch, model_dimension), dtype=jnp.float32)
    pe_table = make_positional_encoding_table(max_len, model_dimension)

    # Eval mode: dropout is identity -> exact check against the pure-JAX reference.
    out_eval = jax.block_until_ready(
        positional_encoding_forward(x, pe_table, p=dropout_p, training=False))
    ref = x + pe_table[:seq_len][:, None, :]
    assert out_eval.shape == (seq_len, batch, model_dimension)
    assert jnp.allclose(out_eval, ref, atol=1e-6, rtol=1e-6)

    # Training mode: every output element must be either 0 (dropped) or (x + pe)/(1-p).
    out_train = jax.block_until_ready(
        positional_encoding_forward(x, pe_table, p=dropout_p, training=True, rng_key=k_drop))
    assert out_train.shape == (seq_len, batch, model_dimension)
    scaled = ref / (1.0 - dropout_p)
    ok = jnp.isclose(out_train, scaled, atol=1e-5) | jnp.isclose(out_train, 0.0, atol=1e-7)
    assert bool(jnp.all(ok))

    print("KERNEL_OK")
</pallas_src>

<mosaic_0001>
module attributes {stable_mosaic.version = 11 : i64} {
  func.func @_pe_add_kernel(%arg0: i32, %arg1: memref<8x64xf32, #tpu.memory_space<vmem>>, %arg2: memref<8x32xf32, #tpu.memory_space<vmem>>, %arg3: memref<8x64xf32, #tpu.memory_space<vmem>>) attributes {dimension_semantics = [#tpu.dimension_semantics<parallel>], iteration_bounds = array<i64: 1>, scalar_prefetch = 0 : i64, scratch_operands = 0 : i64, tpu.core_type = #tpu.core_type<tc>, window_params = [{transform_indices = @transform_0, window_bounds = array<i64: 8, 64>}, {transform_indices = @transform_1, window_bounds = array<i64: 8, 32>}, {transform_indices = @transform_2, window_bounds = array<i64: 8, 64>}]} {
    %c0 = arith.constant 0 : index
    %c0_0 = arith.constant 0 : index
    %0 = vector.load %arg2[%c0, %c0_0] : memref<8x32xf32, #tpu.memory_space<vmem>>, vector<8x32xf32>
    %1 = tpu.concatenate %0, %0 in 1 : vector<8x32xf32>, vector<8x32xf32> -> vector<8x64xf32>
    %c0_1 = arith.constant 0 : index
    %c0_2 = arith.constant 0 : index
    %2 = vector.load %arg1[%c0_1, %c0_2] : memref<8x64xf32, #tpu.memory_space<vmem>>, vector<8x64xf32>
    %3 = arith.addf %2, %1 : vector<8x64xf32>
    %c0_3 = arith.constant 0 : index
    %c0_4 = arith.constant 0 : index
    %4 = vector.load %arg3[%c0_3, %c0_4] : memref<8x64xf32, #tpu.memory_space<vmem>>, vector<8x64xf32>
    tpu.vector_store %arg3[%c0_3, %c0_4], %3 {strides = array<i32>} : memref<8x64xf32, #tpu.memory_space<vmem>>, vector<8x64xf32>,
    return
  }
  func.func @transform_0(%arg0: i32) -> (i32, i32) {
    %c0_i32 = arith.constant 0 : i32
    %c0_i32_0 = arith.constant 0 : i32
    return %arg0, %c0_i32 : i32, i32
  }
  func.func @transform_1(%arg0: i32) -> (i32, i32) {
    %c0_i32 = arith.constant 0 : i32
    %c0_i32_0 = arith.constant 0 : i32
    return %arg0, %c0_i32 : i32, i32
  }
  func.func @transform_2(%arg0: i32) -> (i32, i32) {
    %c0_i32 = arith.constant 0 : i32
    %c0_i32_0 = arith.constant 0 : i32
    return %arg0, %c0_i32 : i32, i32
  }
}

</mosaic_0001>

<llo_original>
// kernel: tpu_custom_call.1
$region0: #{tpu_custom_call.1}
  #allocation0 [shape = 'u32[]', space=smem, size = 0x4, offset = 0x4, fixed_abs, tag = 'smem constant byte address 0x4 - core index']
  #allocation1 [shape = 'u32[72,128]{1,0:T(1,128)}', space=vmem, size = 0x9000, scoped, tag = 'internal scratch']
  %s0 = inlined_call_operand.hbm [shape: f32[8,64], index: 0, kind: input, shape index: {}, may-alias: {0,2}]
  %s1 = inlined_call_operand.vmem [shape: f32[16,32], index: 1, kind: input, shape index: {}]
  %s2 = inlined_call_operand.hbm [shape: f32[8,64], index: 2, kind: output, shape index: {}, may-alias: {0,2}]
  %s3 = sld [smem:[#allocation0]]
  $region22: #{tpu_custom_call.1} parent=0
    _
  %s5 = ssub.s32 1, %s3
  %s6 = scalar_select 0, %s5, %s3
  $region1: #{tpu_custom_call.1} parent=0
    #allocation2 [shape = 'u8[4096]{0}', space=vmem, size = 0x1000, scoped, tag = 'input window, operand 0, single buffered']
    #allocation3 [shape = 's32[1]{0}', space=sflag, size = 0x4, scoped, tag = 'scoped memory for tpu_custom_call.1']
    #allocation4 [shape = 's32[1]{0}', space=sflag, size = 0x4, scoped, tag = 'scoped memory for tpu_custom_call.1']
    #allocation5 [shape = 'u8[4096]{0}', space=vmem, size = 0x1000, scoped, tag = 'output window, operand 0, single buffered']
    %7 = vsyncpa [#allocation3], 0
    %8 = vsyncpa [#allocation4], 0
    // Predicated region
    $region2: #{tpu_custom_call.1} parent=1 // pred_check
      _
    $region3: #{tpu_custom_call.1} parent=1 // pred_check_branch
      %10 = sbr.rel (0) target = $region5
    $region4: #{tpu_custom_call.1} parent=1 // pred_region
      %12 = vsyncadd [#allocation3], 0
      %s14 = sshll.u32 %s0, 4
      %s15 = int_to_ptr.hbm [resolvable:$true] %s14
      %s16 = sshll.u32 [#allocation2], 4
      %s17 = int_to_ptr.vmem [resolvable:$true] %s16
      %19 = dma.hbm_to_vmem [thread:$0]  %s15, 128, %s17, [#allocation3]
    $region5: #{tpu_custom_call.1} parent=1 // pred_fallthru
      _
    // Predicated region
    $region6: #{tpu_custom_call.1} parent=1 // pred_check
      _
    $region7: #{tpu_custom_call.1} parent=1 // pred_check_branch
      %21 = sbr.rel (0) target = $region9
    $region8: #{tpu_custom_call.1} parent=1 // pred_region
      _
    $region9: #{tpu_custom_call.1} parent=1 // pred_fallthru
      _
    // Predicated region
    $region10: #{tpu_custom_call.1} parent=1 // pred_check
      _
    $region11: #{tpu_custom_call.1} parent=1 // pred_check_branch
      %23 = sbr.rel (0) target = $region13
    $region12: #{tpu_custom_call.1} parent=1 // pred_region
      %25 = dma.done [#allocation3], 128
    $region13: #{tpu_custom_call.1} parent=1 // pred_fallthru
      _
    %v26 = vld [vmem:[%s1] sm:$0xff]
    %28 = vrot.lane.b32.xlu0 %v26, 32
    %v29 = vpop.permute.xlu0 %28
    %vm31 = vcmask 261120
    %v32 = vsel %vm31, %v26, %v29
    %v33 = vld [vmem:[#allocation2] sm:$0xff]
    %v34 = vadd.f32 %v33, %v32
    %vm35 = vcmask 523264
    %36 = vst.msk [vmem:[#allocation5] sm:$0xff] %vm35, %v34
    // Predicated region
    $region14: #{tpu_custom_call.1} parent=1 // pred_check
      _
    $region15: #{tpu_custom_call.1} parent=1 // pred_check_branch
      %38 = sbr.rel (0) target = $region17
    $region16: #{tpu_custom_call.1} parent=1 // pred_region
      %40 = vsyncadd [#allocation4], 0
      %s42 = sshll.u32 [#allocation5], 4
      %s43 = int_to_ptr.vmem [resolvable:$true] %s42
      %s44 = sshll.u32 %s2, 4
      %s45 = int_to_ptr.hbm [resolvable:$true] %s44
      %47 = dma.vmem_to_hbm [thread:$0]  %s43, 128, %s45, [#allocation4]
    $region17: #{tpu_custom_call.1} parent=1 // pred_fallthru
      _
    // Predicated region
    $region18: #{tpu_custom_call.1} parent=1 // pred_check
      _
    $region19: #{tpu_custom_call.1} parent=1 // pred_check_branch
      %49 = sbr.rel (0) target = $region21
    $region20: #{tpu_custom_call.1} parent=1 // pred_region
      %51 = dma.done [#allocation4], 128
    $region21: #{tpu_custom_call.1} parent=1 // pred_fallthru
      _
    %52 = vsyncpa [#allocation3], 1
    %53 = vsyncpa [#allocation4], 1

</llo_original>
